<compile_context>
chip_gen: v5e
topology: v5e:2x2
jax: 0.10.0
libtpu: 0.0.40
codegen_flags: <defaults>
</compile_context>

<pallas_src>
import functools
import math
from typing import NamedTuple

import jax
import jax.numpy as jnp
from jax import lax
from jax.experimental import pallas as pl
from jax.experimental.pallas import tpu as pltpu

_MIB = 1 << 20


def _round_up(x, m):
    return (x + m - 1) // m * m


def _vmem_capacity_bytes():
    try:
        return int(pltpu.get_tpu_info().vmem_capacity_bytes)
    except Exception:
        return 64 * _MIB  # conservative fallback (v7x per-core VMEM)


class _Plan(NamedTuple):
    tm: int
    tn: int
    tk: int
    B_pad: int
    C_pad: int
    D_pad: int


def _plan_tiles(B, C, D, in_itemsize):
    """Pick MXU-friendly tiles as large as the VMEM budget allows."""
    sub = 16 if in_itemsize < 4 else 8      # packed second-minor multiple (bf16:16)
    out_itemsize = 4                        # f32 logits / accumulator

    D_pad = _round_up(D, 128)
    if D_pad <= 1024:
        tk = D_pad                          # single K step: no reduction traffic
    else:
        tk = 512
        D_pad = _round_up(D, tk)

    if B <= 256:
        tm = _round_up(B, sub)              # small-B / inference regime
    else:
        tm = min(1024, _round_up(B, sub))
    tn = min(_round_up(C, 128), 2048)

    budget = int(0.6 * _vmem_capacity_bytes())  # headroom for Mosaic internals

    def need(tm_, tn_, tk_):
        # double-buffered input tiles + double-buffered (accumulating) output
        # tile + the tiny norm vectors.
        return (2 * (tm_ * tk_ + tk_ * tn_) * in_itemsize
                + 2 * tm_ * tn_ * out_itemsize
                + 2 * (tm_ + tn_) * 4)

    while need(tm, tn, tk) > budget and tn > 128:
        tn = max(128, (tn // 2) // 128 * 128)
    while need(tm, tn, tk) > budget and tm > sub:
        tm = max(sub, (tm // 2) // sub * sub)

    B_pad = _round_up(B, tm)
    C_pad = _round_up(C, tn)

    # Keep both v7x TensorCores busy: need >= 2 tiles on the parallel axes.
    while (B_pad // tm) * (C_pad // tn) < 2:
        if tn >= 256 and tn >= tm:
            tn = max(128, (tn // 2) // 128 * 128)
            C_pad = _round_up(C, tn)
        elif tm >= 2 * sub:
            tm = max(sub, (tm // 2) // sub * sub)
            B_pad = _round_up(B, tm)
        else:
            break

    return _Plan(tm, tn, tk, B_pad, C_pad, D_pad)


def _dot_precision_for(compute_dtype):
    # Explicit precision choice (review): bf16 operands ride the MXU natively;
    # f32 operands request the exact multi-pass f32 matmul.
    if jnp.dtype(compute_dtype) == jnp.dtype(jnp.float32):
        return lax.Precision.HIGHEST
    return None


def _kernal_metric_kernel(x_ref, wt_ref, xs_ref, ws_ref, out_ref, *,
                          precision, nk):
    # x_ref : (tm, tk) feat tile (compute dtype, fed straight to the MXU)
    # wt_ref: (tk, tn) pre-transposed weights tile
    # xs_ref: (tm, 1)  = -0.05 * ||x_i||^2  (f32, precomputed in wrapper)
    # ws_ref: (1, tn)  = -0.05 * ||w_j||^2  (f32, precomputed in wrapper)
    # out_ref: (tm, tn) f32 logits tile; doubles as the K accumulator.
    def epilogue(acc):
        # -0.05*metric = 0.1*<x,w> + xs + ws ; clamp at 0 so exp(.) <= 1.
        expo = jnp.minimum(0.1 * acc + xs_ref[...] + ws_ref[...], 0.0)
        out_ref[...] = jnp.exp(expo).astype(out_ref.dtype)

    if nk == 1:
        # Single K step (small-B / small-D regime): no accumulator traffic.
        epilogue(jnp.dot(x_ref[...], wt_ref[...],
                         preferred_element_type=jnp.float32,
                         precision=precision))
        return

    k = pl.program_id(2)

    @pl.when(k == 0)
    def _():
        out_ref[...] = jnp.zeros_like(out_ref)

    out_ref[...] += jnp.dot(x_ref[...], wt_ref[...],
                            preferred_element_type=jnp.float32,
                            precision=precision)

    @pl.when(k == nk - 1)
    def _():
        epilogue(out_ref[...])


def _kernal_metric_pallas(feat_p, wt_p, xs_p, ws_p, plan, precision):
    B_pad, D_pad = feat_p.shape
    _, C_pad = wt_p.shape
    tm, tn, tk = plan.tm, plan.tn, plan.tk
    nb, nc, nk = B_pad // tm, C_pad // tn, D_pad // tk
    in_itemsize = feat_p.dtype.itemsize

    vmem_need = (2 * (tm * tk + tk * tn) * in_itemsize
                 + 2 * tm * tn * 4 + 2 * (tm + tn) * 4)
    vmem_limit = int(min(0.9 * _vmem_capacity_bytes(),
                         max(32 * _MIB, 3 * vmem_need // 2)))

    bytes_accessed = (B_pad * D_pad * in_itemsize * nc      # feat re-streamed per j
                      + D_pad * C_pad * in_itemsize * nb    # weights^T per i
                      + B_pad * 4 * nc + C_pad * 4 * nb     # norm vectors
                      + B_pad * C_pad * 4)                  # logits writeback

    return pl.pallas_call(
        functools.partial(_kernal_metric_kernel, precision=precision, nk=nk),
        out_shape=jax.ShapeDtypeStruct((B_pad, C_pad), jnp.float32),
        grid_spec=pltpu.PrefetchScalarGridSpec(
            num_scalar_prefetch=0,
            grid=(nb, nc, nk),
            in_specs=[
                pl.BlockSpec((tm, tk), lambda i, j, k: (i, k)),   # feat
                pl.BlockSpec((tk, tn), lambda i, j, k: (k, j)),   # weights^T
                pl.BlockSpec((tm, 1), lambda i, j, k: (i, 0)),    # -0.05*||x||^2
                pl.BlockSpec((1, tn), lambda i, j, k: (0, j)),    # -0.05*||w||^2
            ],
            out_specs=pl.BlockSpec((tm, tn), lambda i, j, k: (i, j)),
        ),
        compiler_params=pltpu.CompilerParams(
            dimension_semantics=("parallel", "parallel", "arbitrary"),
            vmem_limit_bytes=vmem_limit),
        cost_estimate=pl.CostEstimate(flops=2 * B_pad * C_pad * D_pad,
                                      transcendentals=B_pad * C_pad,
                                      bytes_accessed=int(bytes_accessed)),
    )(feat_p, wt_p, xs_p, ws_p)


def kernal_metric_logits(feat, weights, compute_dtype=jnp.bfloat16):
    """exp(-0.05 * ||feat_i - weights_j||^2) for feat (B, D), weights (C, D)."""
    B, D = feat.shape
    C, Dw = weights.shape
    assert D == Dw
    compute_dtype = jnp.dtype(compute_dtype)
    plan = _plan_tiles(B, C, D, compute_dtype.itemsize)

    f32 = jnp.float32
    x32, w32 = feat.astype(f32), weights.astype(f32)
    xs = (-0.05) * jnp.sum(x32 * x32, axis=-1, keepdims=True)            # (B, 1)
    ws = (-0.05) * jnp.sum(w32 * w32, axis=-1)[None, :]                  # (1, C)

    # Zero padding is exact: padded D columns contribute 0 to both the dot and
    # the norms; padded B rows / C columns are sliced off below.
    feat_p = jnp.pad(feat.astype(compute_dtype),
                     ((0, plan.B_pad - B), (0, plan.D_pad - D)))
    wt_p = jnp.pad(weights.T.astype(compute_dtype),
                   ((0, plan.D_pad - D), (0, plan.C_pad - C)))
    xs_p = jnp.pad(xs, ((0, plan.B_pad - B), (0, 0)))
    ws_p = jnp.pad(ws, ((0, 0), (0, plan.C_pad - C)))

    out = _kernal_metric_pallas(feat_p, wt_p, xs_p, ws_p, plan,
                                _dot_precision_for(compute_dtype))
    return out[:B, :C]


class KernalMetricLogitsJax:
    """JAX/Pallas port of the PyTorch KernalMetricLogits module."""

    def __init__(self, feature_dim, class_num, key, compute_dtype=jnp.bfloat16):
        self.feature_dim = feature_dim
        self.class_num = class_num
        self.compute_dtype = jnp.dtype(compute_dtype)
        # xavier_uniform_ on a (class_num, feature_dim) tensor:
        bound = math.sqrt(6.0 / (feature_dim + class_num))
        self.weights = jax.random.uniform(
            key, (class_num, feature_dim), dtype=jnp.float32,
            minval=-bound, maxval=bound)
        self.scale = math.sqrt(2.0) * math.log(class_num - 1)
        # Cache of the weight-side preprocessing (transpose + pad + norms) so
        # repeated forward calls skip the per-call C x D HBM copies.
        self._weight_cache = {}

    def update_weights(self, new_weights):
        """Reassign weights (e.g. after an optimizer step) and drop the cache."""
        self.weights = new_weights
        self._weight_cache.clear()

    def _weight_side(self, plan):
        key = (plan.C_pad, plan.D_pad, self.compute_dtype.name)
        if key not in self._weight_cache:
            w32 = self.weights.astype(jnp.float32)
            ws = (-0.05) * jnp.sum(w32 * w32, axis=-1)[None, :]          # (1, C)
            wt = self.weights.T.astype(self.compute_dtype)               # (D, C)
            wt_p = jnp.pad(wt, ((0, plan.D_pad - self.feature_dim),
                                (0, plan.C_pad - self.class_num)))
            ws_p = jnp.pad(ws, ((0, 0), (0, plan.C_pad - self.class_num)))
            self._weight_cache[key] = (wt_p, ws_p)
        return self._weight_cache[key]

    def __call__(self, feat, label):
        B, D = feat.shape
        assert D == self.feature_dim
        plan = _plan_tiles(B, self.class_num, D, self.compute_dtype.itemsize)
        wt_p, ws_p = self._weight_side(plan)

        x32 = feat.astype(jnp.float32)
        xs = (-0.05) * jnp.sum(x32 * x32, axis=-1, keepdims=True)        # (B, 1)
        feat_p = jnp.pad(feat.astype(self.compute_dtype),
                         ((0, plan.B_pad - B), (0, plan.D_pad - D)))
        xs_p = jnp.pad(xs, ((0, plan.B_pad - B), (0, 0)))

        out = _kernal_metric_pallas(feat_p, wt_p, xs_p, ws_p, plan,
                                    _dot_precision_for(self.compute_dtype))
        kernal_metric = out[:B, :self.class_num]

        # The reference computes a data-dependent scale via per-sample gathers
        # and .item() host syncs and then immediately overwrites it with 1.0,
        # so the outputs are exactly kernal_metric; the dead bookkeeping is
        # dropped.
        # TODO(synk): re-add the per-batch avg-distance scale bookkeeping if the
        # intermediate self.scale value is ever actually consumed.
        self.scale = 1.0
        valuation_logits = self.scale * kernal_metric
        train_logits = self.scale * kernal_metric
        return train_logits, valuation_logits, self.weights


if __name__ == "__main__":
    key = jax.random.PRNGKey(0)
    k_w, k_x, k_l = jax.random.split(key, 3)

    batch = 8
    feature_dim = 32
    class_num = 16

    module = KernalMetricLogitsJax(feature_dim, class_num, k_w)
    feat = jax.random.normal(k_x, (batch, feature_dim), dtype=jnp.float32)
    label = jax.random.randint(k_l, (batch,), 0, class_num, dtype=jnp.int32)

    train_logits, valuation_logits, weights = module(feat, label)
    jax.block_until_ready((train_logits, valuation_logits, weights))

    # Reference in plain JAX (same math as the PyTorch forward), f32.
    diff = weights[None, :, :] - feat[:, None, :]
    ref = jnp.exp(-0.05 * jnp.sum(diff * diff, axis=-1))

    assert train_logits.shape == (batch, class_num)
    assert valuation_logits.shape == (batch, class_num)
    # Default bf16-MXU path: tolerance bounded by the dot rounding error.
    assert jnp.allclose(train_logits, ref, atol=1e-2, rtol=1e-2)
    assert jnp.allclose(valuation_logits, ref, atol=1e-2, rtol=1e-2)

    # Exact path of the same kernel (f32 operands, Precision.HIGHEST).
    exact = kernal_metric_logits(feat, module.weights, compute_dtype=jnp.float32)
    jax.block_until_ready(exact)
    assert jnp.allclose(exact, ref, atol=1e-5, rtol=1e-5)

    print("KERNEL_OK")
</pallas_src>

<mosaic_0001>
module attributes {stable_mosaic.version = 11 : i64} {
  func.func @_kernal_metric_kernel(%arg0: i32, %arg1: i32, %arg2: i32, %arg3: memref<16x128xbf16, #tpu.memory_space<vmem>>, %arg4: memref<128x128xbf16, #tpu.memory_space<vmem>>, %arg5: memref<16x1xf32, #tpu.memory_space<vmem>>, %arg6: memref<1x128xf32, #tpu.memory_space<vmem>>, %arg7: memref<16x128xf32, #tpu.memory_space<vmem>>) attributes {dimension_semantics = [#tpu.dimension_semantics<parallel>, #tpu.dimension_semantics<parallel>, #tpu.dimension_semantics<arbitrary>], iteration_bounds = array<i64: 1, 1, 1>, scalar_prefetch = 0 : i64, scratch_operands = 0 : i64, tpu.core_type = #tpu.core_type<tc>, window_params = [{transform_indices = @transform_0, window_bounds = array<i64: 16, 128>}, {transform_indices = @transform_1, window_bounds = array<i64: 128, 128>}, {transform_indices = @transform_2, window_bounds = array<i64: 16, 1>}, {transform_indices = @transform_3, window_bounds = array<i64: 1, 128>}, {transform_indices = @transform_4, window_bounds = array<i64: 16, 128>}]} {
    %c0 = arith.constant 0 : index
    %c0_0 = arith.constant 0 : index
    %0 = vector.load %arg3[%c0, %c0_0] : memref<16x128xbf16, #tpu.memory_space<vmem>>, vector<16x128xbf16>
    %c0_1 = arith.constant 0 : index
    %c0_2 = arith.constant 0 : index
    %1 = vector.load %arg4[%c0_1, %c0_2] : memref<128x128xbf16, #tpu.memory_space<vmem>>, vector<128x128xbf16>
    %cst = arith.constant dense<0.000000e+00> : vector<16x128xf32>
    %2 = tpu.matmul %0, %1, %cst {dimension_numbers = #tpu.dot_dimension_numbers<[1], [0], [0], [1], [0, 0, 1, 1], [], []>} : vector<16x128xbf16>, vector<128x128xbf16>, vector<16x128xf32> -> vector<16x128xf32>
    %cst_3 = arith.constant 1.000000e-01 : f32
    %3 = vector.broadcast %cst_3 : f32 to vector<16x128xf32>
    %4 = arith.mulf %3, %2 : vector<16x128xf32>
    %c0_4 = arith.constant 0 : index
    %c0_5 = arith.constant 0 : index
    %5 = vector.load %arg5[%c0_4, %c0_5] : memref<16x1xf32, #tpu.memory_space<vmem>>, vector<16x1xf32>
    %6 = vector.broadcast %5 : vector<16x1xf32> to vector<16x128xf32>
    %7 = arith.addf %4, %6 : vector<16x128xf32>
    %c0_6 = arith.constant 0 : index
    %c0_7 = arith.constant 0 : index
    %8 = vector.load %arg6[%c0_6, %c0_7] : memref<1x128xf32, #tpu.memory_space<vmem>>, vector<1x128xf32>
    %9 = vector.broadcast %8 : vector<1x128xf32> to vector<16x128xf32>
    %10 = arith.addf %7, %9 : vector<16x128xf32>
    %cst_8 = arith.constant 0.000000e+00 : f32
    %11 = vector.broadcast %cst_8 : f32 to vector<16x128xf32>
    %12 = arith.minimumf %10, %11 : vector<16x128xf32>
    %13 = math.exp %12 : vector<16x128xf32>
    %c0_9 = arith.constant 0 : index
    %c0_10 = arith.constant 0 : index
    %14 = vector.load %arg7[%c0_9, %c0_10] : memref<16x128xf32, #tpu.memory_space<vmem>>, vector<16x128xf32>
    tpu.vector_store %arg7[%c0_9, %c0_10], %13 {strides = array<i32>} : memref<16x128xf32, #tpu.memory_space<vmem>>, vector<16x128xf32>,
    return
  }
  func.func @transform_0(%arg0: i32, %arg1: i32, %arg2: i32) -> (i32, i32) {
    %c0_i32 = arith.constant 0 : i32
    return %arg0, %arg2 : i32, i32
  }
  func.func @transform_1(%arg0: i32, %arg1: i32, %arg2: i32) -> (i32, i32) {
    %c0_i32 = arith.constant 0 : i32
    return %arg2, %arg1 : i32, i32
  }
  func.func @transform_2(%arg0: i32, %arg1: i32, %arg2: i32) -> (i32, i32) {
    %c0_i32 = arith.constant 0 : i32
    %c0_i32_0 = arith.constant 0 : i32
    return %arg0, %c0_i32 : i32, i32
  }
  func.func @transform_3(%arg0: i32, %arg1: i32, %arg2: i32) -> (i32, i32) {
    %c0_i32 = arith.constant 0 : i32
    %c0_i32_0 = arith.constant 0 : i32
    return %c0_i32, %arg1 : i32, i32
  }
  func.func @transform_4(%arg0: i32, %arg1: i32, %arg2: i32) -> (i32, i32) {
    %c0_i32 = arith.constant 0 : i32
    return %arg0, %arg1 : i32, i32
  }
}

</mosaic_0001>

<llo_original>
// kernel: tpu_custom_call.1
$region0: #{tpu_custom_call.1}
  #allocation0 [shape = 'u32[]', space=smem, size = 0x4, offset = 0x4, fixed_abs, tag = 'smem constant byte address 0x4 - core index']
  #allocation1 [shape = 'u32[72,128]{1,0:T(1,128)}', space=vmem, size = 0x9000, scoped, tag = 'internal scratch']
  %s0 = inlined_call_operand.vmem [shape: bf16[16,128], index: 0, kind: input, shape index: {}]
  %s1 = inlined_call_operand.hbm [shape: bf16[128,128], index: 1, kind: input, shape index: {}]
  %s2 = inlined_call_operand.vmem [shape: f32[16,1], index: 2, kind: input, shape index: {}]
  %s3 = inlined_call_operand.vmem [shape: f32[1,128], index: 3, kind: input, shape index: {}]
  %s4 = inlined_call_operand.hbm [shape: f32[16,128], index: 4, kind: output, shape index: {}]
  %s5 = sld [smem:[#allocation0]]
  $region30: #{tpu_custom_call.1} parent=0
    _
  %s7 = ssub.s32 1, %s5
  %s8 = scalar_select 0, %s7, %s5
  $region1: #{tpu_custom_call.1} parent=0
    #allocation2 [shape = 'u8[32768]{0}', space=vmem, size = 0x8000, scoped, tag = 'input window, operand 1, single buffered']
    #allocation3 [shape = 's32[1]{0}', space=sflag, size = 0x4, scoped, tag = 'scoped memory for tpu_custom_call.1']
    #allocation4 [shape = 's32[1]{0}', space=sflag, size = 0x4, scoped, tag = 'scoped memory for tpu_custom_call.1']
    #allocation5 [shape = 'u8[8192]{0}', space=vmem, size = 0x2000, scoped, tag = 'output window, operand 0, single buffered']
    %9 = vsyncpa [#allocation3], 0
    %10 = vsyncpa [#allocation4], 0
    // Predicated region
    $region2: #{tpu_custom_call.1} parent=1 // pred_check
      _
    $region3: #{tpu_custom_call.1} parent=1 // pred_check_branch
      %12 = sbr.rel (0) target = $region5
    $region4: #{tpu_custom_call.1} parent=1 // pred_region
      _
    $region5: #{tpu_custom_call.1} parent=1 // pred_fallthru
      _
    // Predicated region
    $region6: #{tpu_custom_call.1} parent=1 // pred_check
      _
    $region7: #{tpu_custom_call.1} parent=1 // pred_check_branch
      %14 = sbr.rel (0) target = $region9
    $region8: #{tpu_custom_call.1} parent=1 // pred_region
      %16 = vsyncadd [#allocation3], 0
      %s17 = sshll.u32 %s1, 4
      %s18 = int_to_ptr.hbm [resolvable:$true] %s17
      %s19 = sshll.u32 [#allocation2], 4
      %s20 = int_to_ptr.vmem [resolvable:$true] %s19
      %25 = dma.hbm_to_vmem [thread:$0]  %s18, 1024, %s20, [#allocation3], 64, 64, 4
    $region9: #{tpu_custom_call.1} parent=1 // pred_fallthru
      _
    // Predicated region
    $region10: #{tpu_custom_call.1} parent=1 // pred_check
      _
    $region11: #{tpu_custom_call.1} parent=1 // pred_check_branch
      %27 = sbr.rel (0) target = $region13
    $region12: #{tpu_custom_call.1} parent=1 // pred_region
      _
    $region13: #{tpu_custom_call.1} parent=1 // pred_fallthru
      _
    // Predicated region
    $region14: #{tpu_custom_call.1} parent=1 // pred_check
      _
    $region15: #{tpu_custom_call.1} parent=1 // pred_check_branch
      %29 = sbr.rel (0) target = $region17
    $region16: #{tpu_custom_call.1} parent=1 // pred_region
      _
    $region17: #{tpu_custom_call.1} parent=1 // pred_fallthru
      _
    // Predicated region
    $region18: #{tpu_custom_call.1} parent=1 // pred_check
      _
    $region19: #{tpu_custom_call.1} parent=1 // pred_check_branch
      %31 = sbr.rel (0) target = $region21
    $region20: #{tpu_custom_call.1} parent=1 // pred_region
      %33 = dma.done [#allocation3], 1024
    $region21: #{tpu_custom_call.1} parent=1 // pred_fallthru
      _
    %v34 = vld [vmem:[%s0] sm:$0xf]
    %v35 = vld [vmem:[%s0 + $0x4] sm:$0xf]
    %v36 = vld [vmem:[#allocation2] sm:$0xf]
    %v37 = vld [vmem:[#allocation2 + $0x4] sm:$0xf]
    %v38 = vld [vmem:[#allocation2 + $0x8] sm:$0xf]
    %v39 = vld [vmem:[#allocation2 + $0xc] sm:$0xf]
    %v40 = vld [vmem:[#allocation2 + $0x10] sm:$0xf]
    %v41 = vld [vmem:[#allocation2 + $0x14] sm:$0xf]
    %v42 = vld [vmem:[#allocation2 + $0x18] sm:$0xf]
    %v43 = vld [vmem:[#allocation2 + $0x1c] sm:$0xf]
    %v44 = vld [vmem:[#allocation2 + $0x20] sm:$0xf]
    %v45 = vld [vmem:[#allocation2 + $0x24] sm:$0xf]
    %v46 = vld [vmem:[#allocation2 + $0x28] sm:$0xf]
    %v47 = vld [vmem:[#allocation2 + $0x2c] sm:$0xf]
    %v48 = vld [vmem:[#allocation2 + $0x30] sm:$0xf]
    %v49 = vld [vmem:[#allocation2 + $0x34] sm:$0xf]
    %v50 = vld [vmem:[#allocation2 + $0x38] sm:$0xf]
    %v51 = vld [vmem:[#allocation2 + $0x3c] sm:$0xf]
    %v54 = vunpack.c.l.b16 %v34
    %v55 = vunpack.c.l.b16 %v35
    %v56 = vpack.c.b16 %v55, %v54
    %v74 = vunpack.c.l.b16 %v36
    %v75 = vunpack.c.l.b16 %v37
    %v76 = vunpack.c.l.b16 %v38
    %v77 = vunpack.c.l.b16 %v39
    %v78 = vunpack.c.l.b16 %v40
    %v79 = vunpack.c.l.b16 %v41
    %v80 = vunpack.c.l.b16 %v42
    %v81 = vunpack.c.l.b16 %v43
    %v82 = vunpack.c.l.b16 %v44
    %v83 = vunpack.c.l.b16 %v45
    %v84 = vunpack.c.l.b16 %v46
    %v85 = vunpack.c.l.b16 %v47
    %v86 = vunpack.c.l.b16 %v48
    %v87 = vunpack.c.l.b16 %v49
    %v88 = vunpack.c.l.b16 %v50
    %v89 = vunpack.c.l.b16 %v51
    %v90 = vpack.c.b16 %v75, %v74
    %v91 = vpack.c.b16 %v77, %v76
    %v92 = vpack.c.b16 %v79, %v78
    %v93 = vpack.c.b16 %v81, %v80
    %v94 = vpack.c.b16 %v83, %v82
    %v95 = vpack.c.b16 %v85, %v84
    %v96 = vpack.c.b16 %v87, %v86
    %v97 = vpack.c.b16 %v89, %v88
    %106 = vmatpush.bf16.msra.mxu0 %v97
    %107 = vmatpush.bf16.msra.mxu0 %v96
    %108 = vmatpush.bf16.msra.mxu0 %v95
    %109 = vmatpush.bf16.msra.mxu0 %v94
    %110 = vmatpush.bf16.msra.mxu0 %v93
    %111 = vmatpush.bf16.msra.mxu0 %v92
    %112 = vmatpush.bf16.msra.mxu0 %v91
    %113 = vmatpush.bf16.msra.mxu0 %v90
    %114 = vmatmul.bf16.gmra.mxu0 %v56
    %v115 = vpop.f32.mrf.mxu0
    %v116 = vadd.f32 0.0, %v115
    %v117 = vpop.f32.mrf.mxu0
    %v118 = vadd.f32 0.0, %v117
    %119 = vdwg.mxu0
    %v120 = vmul.f32 %v116, 0.1
    %v121 = vmul.f32 %v118, 0.1
    %v122 = vld [vmem:[%s2] sm:$0xff]
    %v123 = vld [vmem:[%s2 + $0x8] sm:$0xff]
    %125 = vset.pattern.permute.xlu0 0
    %126 = vperm.xlu0 %125, %v122
    %v127 = vpop.permute.xlu0 %126
    %130 = vset.pattern.permute.xlu0 0
    %131 = vperm.xlu0 %130, %v123
    %v132 = vpop.permute.xlu0 %131
    %v134 = vadd.f32 %v120, %v127
    %v135 = vadd.f32 %v121, %v132
    %v136 = vld [vmem:[%s3] sm:$0x1]
    %v138 = vperm.slane %v136, 0
    %v140 = vadd.f32 %v134, %v138
    %v141 = vadd.f32 %v135, %v138
    %v142 = vmin.f32 %v140, 0.0
    %v143 = vmin.f32 %v141, 0.0
    %v144 = vmul.f32 %v142, 1.442695
    %v145 = vpow.pop %v144
    %v146 = vmul.f32 %v143, 1.442695
    %v147 = vpow.pop %v146
    %148 = vst [vmem:[#allocation5] sm:$0xff] %v145
    %149 = vst [vmem:[#allocation5 + $0x8] sm:$0xff] %v147
    // Predicated region
    $region22: #{tpu_custom_call.1} parent=1 // pred_check
      _
    $region23: #{tpu_custom_call.1} parent=1 // pred_check_branch
      %151 = sbr.rel (0) target = $region25
    $region24: #{tpu_custom_call.1} parent=1 // pred_region
      %153 = vsyncadd [#allocation4], 0
      %s154 = sshll.u32 [#allocation5], 4
      %s155 = int_to_ptr.vmem [resolvable:$true] %s154
      %s156 = sshll.u32 %s4, 4
      %s157 = int_to_ptr.hbm [resolvable:$true] %s156
      %162 = dma.vmem_to_hbm [thread:$0]  %s155, 256, %s157, [#allocation4], 128, 128, 8
    $region25: #{tpu_custom_call.1} parent=1 // pred_fallthru
      _
    // Predicated region
    $region26: #{tpu_custom_call.1} parent=1 // pred_check
      _
    $region27: #{tpu_custom_call.1} parent=1 // pred_check_branch
      %164 = sbr.rel (0) target = $region29
    $region28: #{tpu_custom_call.1} parent=1 // pred_region
      %166 = dma.done [#allocation4], 256
    $region29: #{tpu_custom_call.1} parent=1 // pred_fallthru
      _
    %167 = vsyncpa [#allocation3], 1
    %168 = vsyncpa [#allocation4], 1

</llo_original>
